<compile_context>
chip_gen: v6e
topology: v6e:2x2x1
jax: 0.10.0
libtpu: 0.0.40
codegen_flags: <defaults>
</compile_context>

<pallas_src>
import jax
import jax.numpy as jnp
from jax.experimental import pallas as pl
from jax.experimental.pallas import tpu as pltpu

_LANE = 128
_SUBLANE = 8


def _round_up(x, m):
    return ((x + m - 1) // m) * m


def _pick_tile_hw(hw, n, tile_hw):
    """Lane tile along H*W: a multiple of 128 (or the full extent), sized to
    keep >= ~4 total grid steps (v7x megacore + DMA/compute pipelining)
    without over-tiling small feature maps."""
    if hw <= _LANE:
        return hw                                    # full-extent block
    desired = min(max(_LANE, (tile_hw // _LANE) * _LANE), 8192)
    min_hw_blocks = max(1, -(-4 // n))               # ceil(4 / N)
    cap = _round_up(-(-hw // min_hw_blocks), _LANE)  # round_up(ceil(hw/blocks), 128)
    return max(_LANE, min(desired, cap))


def _landmark_head_kernel(x_ref, w_ref, b_ref, o_ref):
    # x_ref: (Cin, t_hw)      NCHW slab; Cin on sublanes, HW (pixels) on lanes
    # w_ref: (Cout_pad, Cin)  zero-padded to a sublane multiple (30 -> 32)
    # b_ref: (Cout_pad, 1)
    # o_ref: (t_hw, Cout)     NHWC block, stored directly (no post-kernel pass)
    cout = o_ref.shape[-1]
    # MXU: (Cout_pad, Cin) @ (Cin, t_hw), f32 accumulation.
    acc = jnp.dot(w_ref[...], x_ref[...], preferred_element_type=jnp.float32)
    acc = acc + b_ref[...]                           # bias broadcast along lanes
    # XLU transpose to pixel-major; drop the padded channels at the store.
    # NOTE: on a ragged boundary block the tail pixels (lanes of x / rows of
    # o_ref) hold garbage.  Columns are fully independent here (no cross-lane
    # reduction) and Pallas masks the out-of-range rows on writeback — do NOT
    # add any cross-pixel reduction to this kernel without masking those lanes.
    o_ref[...] = acc.T[:, :cout].astype(o_ref.dtype)


def landmark_head_forward(x_nchw, weight, bias, *, num_anchors=3, tile_hw=4096):
    """x_nchw: (N, Cin, H, W); weight: (Cout, Cin, 1, 1); bias: (Cout,).

    Returns (N, H*W*num_anchors, 10) in x_nchw.dtype, matching the PyTorch
    module.  Works for f32 or bf16 I/O (accumulation is always f32).
    """
    N, Cin, H, W = x_nchw.shape
    Cout = weight.shape[0]
    assert Cout == num_anchors * 10
    HW = H * W

    # Pure views / tiny relayouts — no full-activation transpose pass.
    x_chw = x_nchw.reshape(N, Cin, HW)               # (N, Cin, HW)
    w_mat = weight[:, :, 0, 0]                       # (Cout, Cin)

    # Zero-pad output channels to a sublane multiple (30 -> 32): keeps the
    # MXU result and the in-kernel transpose 8-aligned.  Padded rows never
    # reach HBM (sliced off at the store).
    Cout_pad = _round_up(Cout, _SUBLANE)
    w_pad = jnp.zeros((Cout_pad, Cin), w_mat.dtype).at[:Cout].set(w_mat)
    b_pad = jnp.zeros((Cout_pad, 1), bias.dtype).at[:Cout, 0].set(bias)

    t_hw = _pick_tile_hw(HW, N, tile_hw)
    n_hw_blocks = pl.cdiv(HW, t_hw)                  # boundary block masked by Pallas

    itemsize = jnp.dtype(x_nchw.dtype).itemsize
    cost = pl.CostEstimate(
        flops=2 * N * HW * Cin * Cout_pad,
        transcendentals=0,
        bytes_accessed=(N * Cin * HW + N * Cout * HW) * itemsize
        + (Cout_pad * Cin + Cout_pad) * jnp.dtype(weight.dtype).itemsize,
    )

    out_nhwc = pl.pallas_call(
        _landmark_head_kernel,
        out_shape=jax.ShapeDtypeStruct((N, HW, Cout), x_nchw.dtype),
        grid_spec=pltpu.PrefetchScalarGridSpec(
            num_scalar_prefetch=0,
            grid=(N, n_hw_blocks),
            in_specs=[
                # batch dim squeezed out of the kernel view
                pl.BlockSpec((None, Cin, t_hw), lambda n, j: (n, 0, j)),
                # weight / bias: grid-invariant, VMEM-resident across the grid
                pl.BlockSpec((Cout_pad, Cin), lambda n, j: (0, 0)),
                pl.BlockSpec((Cout_pad, 1), lambda n, j: (0, 0)),
            ],
            out_specs=pl.BlockSpec((None, t_hw, Cout), lambda n, j: (n, j, 0)),
        ),
        compiler_params=pltpu.CompilerParams(
            dimension_semantics=("parallel", "parallel")),
        cost_estimate=cost,
    )(x_chw, w_pad, b_pad)

    # (N, HW, Cout) -> (N, H*W*num_anchors, 10): contiguous view, no HBM pass.
    return out_nhwc.reshape(N, HW * num_anchors, 10)


if __name__ == "__main__":
    key = jax.random.PRNGKey(0)
    k_x, k_w, k_b, k_x2 = jax.random.split(key, 4)

    num_anchors = 3
    Cout = num_anchors * 10
    Cin = 32

    def reference(x, w, b):
        r = jnp.einsum("nchw,oc->nhwo", x, w[:, :, 0, 0]) + b
        return r.reshape(x.shape[0], -1, 10)

    # Case 1: batch=2, 16x16 feature map (HW divides the 128-lane tile).
    N, H, W = 2, 16, 16
    x = jax.random.normal(k_x, (N, Cin, H, W), dtype=jnp.float32)
    weight = jax.random.normal(k_w, (Cout, Cin, 1, 1), dtype=jnp.float32) * 0.05
    bias = jax.random.normal(k_b, (Cout,), dtype=jnp.float32) * 0.01

    out = landmark_head_forward(x, weight, bias, num_anchors=num_anchors)
    out = jax.block_until_ready(out)
    ref = reference(x, weight, bias)
    assert out.shape == (N, H * W * num_anchors, 10)
    assert jnp.allclose(out, ref, atol=1e-4, rtol=1e-4)

    # Case 2: batch=1, 20x20 feature map — exercises the ragged boundary
    # block (HW=400 is not a multiple of the 128-lane tile) and the
    # min-grid-steps tiling path.
    N2, H2, W2 = 1, 20, 20
    x2 = jax.random.normal(k_x2, (N2, Cin, H2, W2), dtype=jnp.float32)
    out2 = landmark_head_forward(x2, weight, bias, num_anchors=num_anchors)
    out2 = jax.block_until_ready(out2)
    ref2 = reference(x2, weight, bias)
    assert out2.shape == (N2, H2 * W2 * num_anchors, 10)
    assert jnp.allclose(out2, ref2, atol=1e-4, rtol=1e-4)

    print("KERNEL_OK")
</pallas_src>

<mosaic_0001>
module attributes {stable_mosaic.version = 11 : i64} {
  func.func @_landmark_head_kernel(%arg0: i32, %arg1: i32, %arg2: memref<1x32x128xf32, #tpu.memory_space<vmem>>, %arg3: memref<32x32xf32, #tpu.memory_space<vmem>>, %arg4: memref<32x1xf32, #tpu.memory_space<vmem>>, %arg5: memref<1x128x30xf32, #tpu.memory_space<vmem>>) attributes {dimension_semantics = [#tpu.dimension_semantics<parallel>, #tpu.dimension_semantics<parallel>], iteration_bounds = array<i64: 2, 2>, scalar_prefetch = 0 : i64, scratch_operands = 0 : i64, tpu.core_type = #tpu.core_type<tc>, window_params = [{transform_indices = @transform_0, window_bounds = array<i64: 1, 32, 128>}, {pipeline_mode = #tpu.pipeline_mode<synchronous>, transform_indices = @transform_1, window_bounds = array<i64: 32, 32>}, {pipeline_mode = #tpu.pipeline_mode<synchronous>, transform_indices = @transform_2, window_bounds = array<i64: 32, 1>}, {transform_indices = @transform_3, window_bounds = array<i64: 1, 128, 30>}]} {
    %c0 = arith.constant 0 : index
    %c0_0 = arith.constant 0 : index
    %0 = vector.load %arg3[%c0, %c0_0] : memref<32x32xf32, #tpu.memory_space<vmem>>, vector<32x32xf32>
    %c0_1 = arith.constant 0 : index
    %c0_2 = arith.constant 0 : index
    %c0_3 = arith.constant 0 : index
    %1 = vector.load %arg2[%c0_1, %c0_2, %c0_3] : memref<1x32x128xf32, #tpu.memory_space<vmem>>, vector<1x32x128xf32>
    %2 = vector.shape_cast %1 : vector<1x32x128xf32> to vector<32x128xf32>
    %cst = arith.constant dense<0.000000e+00> : vector<32x128xf32>
    %3 = tpu.matmul %0, %2, %cst {dimension_numbers = #tpu.dot_dimension_numbers<[1], [0], [0], [1], [0, 0, 1, 1], [], []>} : vector<32x32xf32>, vector<32x128xf32>, vector<32x128xf32> -> vector<32x128xf32>
    %c0_4 = arith.constant 0 : index
    %c0_5 = arith.constant 0 : index
    %4 = vector.load %arg4[%c0_4, %c0_5] : memref<32x1xf32, #tpu.memory_space<vmem>>, vector<32x1xf32>
    %5 = vector.broadcast %4 : vector<32x1xf32> to vector<32x128xf32>
    %6 = arith.addf %3, %5 : vector<32x128xf32>
    %7 = tpu.transpose %6, [1, 0] : vector<32x128xf32> -> vector<128x32xf32>
    %8 = vector.extract_strided_slice %7 {offsets = [0, 0], sizes = [128, 30], strides = [1, 1]} : vector<128x32xf32> to vector<128x30xf32>
    %c0_6 = arith.constant 0 : index
    %c0_7 = arith.constant 0 : index
    %c0_8 = arith.constant 0 : index
    %9 = vector.load %arg5[%c0_6, %c0_7, %c0_8] : memref<1x128x30xf32, #tpu.memory_space<vmem>>, vector<1x128x30xf32>
    %10 = vector.shape_cast %9 : vector<1x128x30xf32> to vector<128x30xf32>
    %11 = vector.shape_cast %8 : vector<128x30xf32> to vector<1x128x30xf32>
    tpu.vector_store %arg5[%c0_6, %c0_7, %c0_8], %11 {strides = array<i32>} : memref<1x128x30xf32, #tpu.memory_space<vmem>>, vector<1x128x30xf32>,
    return
  }
  func.func @transform_0(%arg0: i32, %arg1: i32) -> (i32, i32, i32) {
    %c0_i32 = arith.constant 0 : i32
    %c0_i32_0 = arith.constant 0 : i32
    return %arg0, %c0_i32, %arg1 : i32, i32, i32
  }
  func.func @transform_1(%arg0: i32, %arg1: i32) -> (i32, i32) {
    %c0_i32 = arith.constant 0 : i32
    %c0_i32_0 = arith.constant 0 : i32
    %c0_i32_1 = arith.constant 0 : i32
    return %c0_i32, %c0_i32_0 : i32, i32
  }
  func.func @transform_2(%arg0: i32, %arg1: i32) -> (i32, i32) {
    %c0_i32 = arith.constant 0 : i32
    %c0_i32_0 = arith.constant 0 : i32
    %c0_i32_1 = arith.constant 0 : i32
    return %c0_i32, %c0_i32_0 : i32, i32
  }
  func.func @transform_3(%arg0: i32, %arg1: i32) -> (i32, i32, i32) {
    %c0_i32 = arith.constant 0 : i32
    %c0_i32_0 = arith.constant 0 : i32
    return %arg0, %arg1, %c0_i32 : i32, i32, i32
  }
}

</mosaic_0001>

<llo_original>
// kernel: tpu_custom_call.1
$region0: #{tpu_custom_call.1}
  #allocation0 [shape = 'u32[]', space=smem, size = 0x4, offset = 0x4, fixed_abs, tag = 'smem constant byte address 0x4 - core index']
  #allocation1 [shape = 'u32[144,128]{1,0:T(1,128)}', space=vmem, size = 0x12000, scoped, tag = 'internal scratch']
  %s0 = inlined_call_operand.hbm [shape: f32[2,32,256], index: 0, kind: input, shape index: {}]
  %s1 = inlined_call_operand.vmem [shape: f32[32,32], index: 1, kind: input, shape index: {}]
  %s2 = inlined_call_operand.vmem [shape: f32[32,1], index: 2, kind: input, shape index: {}]
  %s3 = inlined_call_operand.vmem [shape: f32[2,256,30], index: 3, kind: output, shape index: {}]
  %s4 = sld [smem:[#allocation0]]
  $region49: #{tpu_custom_call.1} parent=0
    _
  %s6 = ssub.s32 1, %s4
  %s7 = scalar_select 0, %s6, %s4
  $region1: #{tpu_custom_call.1} parent=0
    #allocation2 [shape = 'u8[32768]{0}', space=vmem, size = 0x8000, scoped, tag = 'input window, operand 0']
    #allocation3 [shape = 's32[2]{0}', space=sflag, size = 0x8, scoped, tag = 'scoped memory for tpu_custom_call.1']
    %8 = vsyncpa [#allocation3], 0
    %s9 = scalar_lea.sflag [#allocation3], 1
    %10 = vsyncpa %s9, 0
    loop: start=0, step=1, limit=6
    $region2: #{tpu_custom_call.1} parent=1 // loop_pre_header
      _
    $region3: #{tpu_custom_call.1} parent=1 // loop_header
      %s12 = sphi 0, %s16
      %p13 = scmp.ge.s32.totalorder %s12, 6
      %s19 = sphi 0, %s31
      %s20 = sphi 0, %s27
      %s21 = sphi 0, %s19
      %s22 = sphi 0, %s20
      %s23 = sphi 0, %s21
      %s24 = sphi 0, %s22
      %s36 = sphi 0, %s38
      %s39 = sphi 0, %s36
      %s40 = sphi 0, %s39
      %s56 = sphi 0, %s40
      %s60 = sphi 0, %s60
      %s62 = sphi 0, %s60
      %s63 = sphi 0, %s62
      %s77 = sphi 0, %s63
      %s81 = sphi 0, %s81
      %s83 = sphi 0, %s81
      %s84 = sphi 0, %s83
      %s98 = sphi 0, %s84
      %s106 = sphi 0, %s108
      %s109 = sphi 0, %s106
      %s110 = sphi 0, %s109
      %s126 = sphi 0, %s110
    $region4: #{tpu_custom_call.1} parent=1 // loop_header_branch
      %15 = sbr.rel (%p13) target = $region8
    $region5: #{tpu_custom_call.1} parent=1 // loop_body
      %s17 = ssub.s32 %s12, 1
      %s18 = ssub.s32 %s12, 2
      %s25 = sadd.s32 1, %s20
      %p26 = scmp.ge.s32.totalorder %s25, 2
      %s27 = scalar_select %p26, 0, %s25
      %s28 = sadd.s32 1, %s19
      %s29 = scalar_select %p26, %s28, %s19
      %p30 = scmp.ge.s32.totalorder %s29, 2
      %s31 = scalar_select %p30, 0, %s29
      %s32 = ssub.s32 %s19, %s31
      %s33 = ssub.s32 %s20, %s27
      %s34 = sor.u32 %s32, %s33
      %p35 = scmp.eq.s32.totalorder %s34, 0
      %s37 = sadd.s32 %s36, 1
      %s38 = scalar_select %p35, %s36, %s37
      %p41 = pneg %p35
      %p42 = scmp.eq.s32.totalorder %s12, 3
      %p43 = por %p41, %p42
      %p44 = scmp.ne.s32.totalorder %s36, %s39
      %p45 = scmp.eq.s32.totalorder %s12, 0
      %p46 = por %p44, %p45
      %p47 = scmp.ne.s32.totalorder %s36, %s39
      %p48 = scmp.eq.s32.totalorder %s17, 3
      %p49 = por %p47, %p48
      %p50 = scmp.ne.s32.totalorder %s39, %s40
      %p51 = scmp.eq.s32.totalorder %s17, 0
      %p52 = por %p50, %p51
      %p53 = scmp.ne.s32.totalorder %s39, %s40
      %p54 = scmp.eq.s32.totalorder %s18, 3
      %p55 = por %p53, %p54
      %p57 = scmp.ne.s32.totalorder %s40, %s56
      %p58 = scmp.eq.s32.totalorder %s18, 0
      %p59 = por %p57, %p58
      %s61 = sadd.s32 %s60, 1
      %p64 = scmp.eq.s32.totalorder %s12, 3
      %p65 = scmp.ne.s32.totalorder %s60, %s62
      %p66 = scmp.eq.s32.totalorder %s12, 0
      %p67 = por %p65, %p66
      %p68 = scmp.ne.s32.totalorder %s60, %s62
      %p69 = scmp.eq.s32.totalorder %s17, 3
      %p70 = por %p68, %p69
      %p71 = scmp.ne.s32.totalorder %s62, %s63
      %p72 = scmp.eq.s32.totalorder %s17, 0
      %p73 = por %p71, %p72
      %p74 = scmp.ne.s32.totalorder %s62, %s63
      %p75 = scmp.eq.s32.totalorder %s18, 3
      %p76 = por %p74, %p75
      %p78 = scmp.ne.s32.totalorder %s63, %s77
      %p79 = scmp.eq.s32.totalorder %s18, 0
      %p80 = por %p78, %p79
      %s82 = sadd.s32 %s81, 1
      %p85 = scmp.eq.s32.totalorder %s12, 3
      %p86 = scmp.ne.s32.totalorder %s81, %s83
      %p87 = scmp.eq.s32.totalorder %s12, 0
      %p88 = por %p86, %p87
      %p89 = scmp.ne.s32.totalorder %s81, %s83
      %p90 = scmp.eq.s32.totalorder %s17, 3
      %p91 = por %p89, %p90
      %p92 = scmp.ne.s32.totalorder %s83, %s84
      %p93 = scmp.eq.s32.totalorder %s17, 0
      %p94 = por %p92, %p93
      %p95 = scmp.ne.s32.totalorder %s83, %s84
      %p96 = scmp.eq.s32.totalorder %s18, 3
      %p97 = por %p95, %p96
      %p99 = scmp.ne.s32.totalorder %s84, %s98
      %p100 = scmp.eq.s32.totalorder %s18, 0
      %p101 = por %p99, %p100
      %s102 = ssub.s32 %s19, %s31
      %s103 = ssub.s32 %s20, %s27
      %s104 = sor.u32 %s102, %s103
      %p105 = scmp.eq.s32.totalorder %s104, 0
      %s107 = sadd.s32 %s106, 1
      %s108 = scalar_select %p105, %s106, %s107
      %p111 = pneg %p105
      %p112 = scmp.eq.s32.totalorder %s12, 3
      %p113 = por %p111, %p112
      %p114 = scmp.ne.s32.totalorder %s106, %s109
      %p115 = scmp.eq.s32.totalorder %s12, 0
      %p116 = por %p114, %p115
      %p117 = scmp.ne.s32.totalorder %s106, %s109
      %p118 = scmp.eq.s32.totalorder %s17, 3
      %p119 = por %p117, %p118
      %p120 = scmp.ne.s32.totalorder %s109, %s110
      %p121 = scmp.eq.s32.totalorder %s17, 0
      %p122 = por %p120, %p121
      %p123 = scmp.ne.s32.totalorder %s109, %s110
      %p124 = scmp.eq.s32.totalorder %s18, 3
      %p125 = por %p123, %p124
      %p127 = scmp.ne.s32.totalorder %s110, %s126
      %p128 = scmp.eq.s32.totalorder %s18, 0
      %p129 = por %p127, %p128
      %p130 = scmp.le.s32.totalorder 1, %s12
      %p131 = scmp.lt.s32.totalorder %s12, 5
      %p132 = pnand %p130, %p131
      %p133 = pneg %p132
      // Predicated region
      $region9: #{tpu_custom_call.1} parent=5 // pred_check
        _
      $region10: #{tpu_custom_call.1} parent=5 // pred_check_branch
        %135 = sbr.rel (%p132) target = $region12
      $region11: #{tpu_custom_call.1} parent=5 // pred_region
        %s136 = ssub.s32 %s12, 1
        // Predicated region
        $region13: #{tpu_custom_call.1} parent=11 // pred_check
          %p137 = pneg %p73
        $region14: #{tpu_custom_call.1} parent=11 // pred_check_branch
          %139 = sbr.rel (%p137) target = $region16
        $region15: #{tpu_custom_call.1} parent=11 // pred_region
          _
        $region16: #{tpu_custom_call.1} parent=11 // pred_fallthru
          _
        // Predicated region
        $region17: #{tpu_custom_call.1} parent=11 // pred_check
          %p140 = pneg %p94
        $region18: #{tpu_custom_call.1} parent=11 // pred_check_branch
          %142 = sbr.rel (%p140) target = $region20
        $region19: #{tpu_custom_call.1} parent=11 // pred_region
          _
        $region20: #{tpu_custom_call.1} parent=11 // pred_fallthru
          _
      $region12: #{tpu_custom_call.1} parent=5 // pred_fallthru
        _
      %p143 = scmp.lt.s32.totalorder %s12, 4
      // Predicated region
      $region21: #{tpu_custom_call.1} parent=5 // pred_check
        %p144 = pneg %p143
      $region22: #{tpu_custom_call.1} parent=5 // pred_check_branch
        %146 = sbr.rel (%p144) target = $region24
      $region23: #{tpu_custom_call.1} parent=5 // pred_region
        // Predicated region
        $region25: #{tpu_custom_call.1} parent=23 // pred_check
          %p147 = pneg %p46
        $region26: #{tpu_custom_call.1} parent=23 // pred_check_branch
          %149 = sbr.rel (%p147) target = $region28
        $region27: #{tpu_custom_call.1} parent=23 // pred_region
          %s150 = sand.u32 %s36, 1
          %s151 = scalar_lea.sflag [#allocation3], %s150
          %s152 = sand.u32 %s36, 1
          %s153 = smul.addr %s152, 32
          %s154 = scalar_lea.vmem [#allocation2], %s153
          %s156 = ssub.s32 512, 512
          %157 = vsyncadd %s151, %s156
          %s158 = smul.addr %s19, 8
          %s159 = sadd.s32 %s20, %s158
          %s160 = smul.addr %s159, 128
          %s161 = scalar_lea.hbm %s0, %s160
          %s162 = sshll.u32 %s154, 4
          %s163 = int_to_ptr.vmem [resolvable:$true] %s162
          %168 = dma.hbm_to_vmem [thread:$0]  %s161, 512, %s163, %s151, 256, 128, 8
        $region28: #{tpu_custom_call.1} parent=23 // pred_fallthru
          _
      $region24: #{tpu_custom_call.1} parent=5 // pred_fallthru
        _
      %p169 = scmp.le.s32.totalorder 1, %s12
      %p170 = scmp.lt.s32.totalorder %s12, 5
      %p171 = pnand %p169, %p170
      %p172 = pneg %p171
      // Predicated region
      $region29: #{tpu_custom_call.1} parent=5 // pred_check
        _
      $region30: #{tpu_custom_call.1} parent=5 // pred_check_branch
        %174 = sbr.rel (%p171) target = $region32
      $region31: #{tpu_custom_call.1} parent=5 // pred_region
        %s175 = ssub.s32 %s12, 1
        %s176 = sand.u32 %s39, 1
        %s177 = scalar_lea.sflag [#allocation3], %s176
        %s178 = sand.u32 %s39, 1
        %s179 = smul.addr %s178, 32
        %s180 = scalar_lea.vmem [#allocation2], %s179
        // Predicated region
        $region33: #{tpu_custom_call.1} parent=31 // pred_check
          %p181 = pneg %p52
        $region34: #{tpu_custom_call.1} parent=31 // pred_check_branch
          %183 = sbr.rel (%p181) target = $region36
        $region35: #{tpu_custom_call.1} parent=31 // pred_region
          %184 = dma.done %s177, 512
        $region36: #{tpu_custom_call.1} parent=31 // pred_fallthru
          _
        %s185 = sand.u32 %s39, 1
        %s186 = scalar_lea.sflag [#allocation3], %s185
        %s187 = sand.u32 %s39, 1
        %s188 = smul.addr %s187, 32
        %s189 = scalar_lea.vmem [#allocation2], %s188
        %p190 = pneg %p52
        %p191 = pneg %p49
        %p192 = pneg %p73
        %p193 = pneg %p70
        %p194 = pneg %p94
        %p195 = pneg %p91
        %p196 = pneg %p122
        %p197 = pneg %p119
        %s198 = smul.u32 16, %s22
        %p199 = scmp.lt.s32.totalorder %s21, 1
        %s200 = scalar_select %p199, %s21, 1
        %p201 = scmp.lt.s32.totalorder %s198, 31
        %s202 = scalar_select %p201, %s198, 31
        %s203 = smul.addr %s200, 32
        %s204 = sadd.s32 %s202, %s203
        %s205 = smul.addr %s204, 8
        %s206 = scalar_lea.vmem %s3, %s205
        %s207 = smul.u32 16, %s22
        %p208 = scmp.lt.s32.totalorder %s21, 1
        %s209 = scalar_select %p208, %s21, 1
        %p210 = scmp.lt.s32.totalorder %s207, 31
        %s211 = scalar_select %p210, %s207, 31
        %s212 = smul.addr %s209, 32
        %s213 = sadd.s32 %s211, %s212
        %s214 = smul.addr %s213, 8
        %s215 = scalar_lea.vmem %s3, %s214
        %s216 = smul.u32 16, %s22
        %v217 = vld [vmem:[%s1] sm:$0xff]
        %v218 = vld [vmem:[%s1 + $0x8] sm:$0xff]
        %v219 = vld [vmem:[%s1 + $0x10] sm:$0xff]
        %v220 = vld [vmem:[%s1 + $0x18] sm:$0xff]
        %v221 = vld [vmem:[%s180] sm:$0xff]
        %v222 = vld [vmem:[%s180 + $0x8] sm:$0xff]
        %v223 = vld [vmem:[%s180 + $0x10] sm:$0xff]
        %v224 = vld [vmem:[%s180 + $0x18] sm:$0xff]
        %v225 = vld [vmem:[%s2] sm:$0xff]
        %v226 = vld [vmem:[%s2 + $0x8] sm:$0xff]
        %v227 = vld [vmem:[%s2 + $0x10] sm:$0xff]
        %v228 = vld [vmem:[%s2 + $0x18] sm:$0xff]
        %230 = vset.pattern.permute.xlu0 0
        %231 = vperm.xlu0 %230, %v225
        %v232 = vpop.permute.xlu0 %231
        %235 = vset.pattern.permute.xlu0 0
        %236 = vperm.xlu0 %235, %v226
        %v237 = vpop.permute.xlu0 %236
        %240 = vset.pattern.permute.xlu0 0
        %241 = vperm.xlu0 %240, %v227
        %v242 = vpop.permute.xlu0 %241
        %245 = vset.pattern.permute.xlu0 0
        %246 = vperm.xlu0 %245, %v228
        %v247 = vpop.permute.xlu0 %246
        %vm249 = vcmask 261120
        %v251 = vsel %vm249, %v217, 0
        %v254 = vsel %vm249, %v218, 0
        %v257 = vsel %vm249, %v219, 0
        %v260 = vsel %vm249, %v220, 0
        %262 = vmatprep.subr.mxu0 0.0
        %263 = vmatpush1.msra.mxu0 0.0
        %264 = vmatprep.subr.mxu0 0.0
        %265 = vmatpush1.msra.mxu0 0.0
        %266 = vmatprep.subr.mxu0 0.0
        %267 = vmatpush1.msra.mxu0 0.0
        %268 = vmatprep.subr.mxu0 0.0
        %269 = vmatpush1.msra.mxu0 0.0
        %270 = vmatprep.subr.mxu0 0.0
        %271 = vmatpush1.msra.mxu0 0.0
        %272 = vmatprep.subr.mxu0 0.0
        %273 = vmatpush1.msra.mxu0 0.0
        %274 = vmatprep.subr.mxu0 0.0
        %275 = vmatpush1.msra.mxu0 0.0
        %276 = vmatprep.subr.mxu0 0.0
        %277 = vmatpush1.msra.mxu0 0.0
        %278 = vmatprep.subr.mxu0 0.0
        %279 = vmatpush1.msra.mxu0 0.0
        %280 = vmatprep.subr.mxu0 0.0
        %281 = vmatpush1.msra.mxu0 0.0
        %282 = vmatprep.subr.mxu0 0.0
        %283 = vmatpush1.msra.mxu0 0.0
        %284 = vmatprep.subr.mxu0 0.0
        %285 = vmatpush1.msra.mxu0 0.0
        %286 = vmatprep.subr.mxu0 0.0
        %287 = vmatpush1.msra.mxu0 %v224
        %288 = vmatprep.subr.mxu0 0.0
        %289 = vmatpush1.msra.mxu0 %v223
        %290 = vmatprep.subr.mxu0 0.0
        %291 = vmatpush1.msra.mxu0 %v222
        %292 = vmatprep.subr.mxu0 0.0
        %293 = vmatpush1.msra.mxu0 %v221
        %294 = vmatprep.subr.mxu0 0.0
        %295 = vmatpush2.msra.mxu0 0.0
        %296 = vmatprep.subr.mxu0 0.0
        %297 = vmatpush2.msra.mxu0 0.0
        %298 = vmatprep.subr.mxu0 0.0
        %299 = vmatpush2.msra.mxu0 0.0
        %300 = vmatprep.subr.mxu0 0.0
        %301 = vmatpush2.msra.mxu0 0.0
        %302 = vmatprep.subr.mxu0 0.0
        %303 = vmatpush2.msra.mxu0 0.0
        %304 = vmatprep.subr.mxu0 0.0
        %305 = vmatpush2.msra.mxu0 0.0
        %306 = vmatprep.subr.mxu0 0.0
        %307 = vmatpush2.msra.mxu0 0.0
        %308 = vmatprep.subr.mxu0 0.0
        %309 = vmatpush2.msra.mxu0 0.0
        %310 = vmatprep.subr.mxu0 0.0
        %311 = vmatpush2.msra.mxu0 0.0
        %312 = vmatprep.subr.mxu0 0.0
        %313 = vmatpush2.msra.mxu0 0.0
        %314 = vmatprep.subr.mxu0 0.0
        %315 = vmatpush2.msra.mxu0 0.0
        %316 = vmatprep.subr.mxu0 0.0
        %317 = vmatpush2.msra.mxu0 0.0
        %318 = vmatprep.subr.mxu0 0.0
        %319 = vmatpush2.msra.mxu0 0.0
        %320 = vmatprep.subr.mxu0 0.0
        %321 = vmatpush2.msra.mxu0 0.0
        %322 = vmatprep.subr.mxu0 0.0
        %323 = vmatpush2.msra.mxu0 0.0
        %324 = vmatprep.subr.mxu0 0.0
        %325 = vmatpush2.msra.mxu0 0.0
        %326 = vmatprep.mubr.f32.mxu0 0.0
        %327 = vmatmul.mubr.f32.gmra.mxu0 %v251
        %v328 = vpop.f32.mrf.mxu0
        %v329 = vadd.f32 %v232, %v328
        %v330 = vpop.f32.mrf.mxu0
        %331 = vmatprep.mubr.f32.mxu0 0.0
        %332 = vmatmul.mubr.f32.gmra.mxu0 %v254
        %v333 = vpop.f32.mrf.mxu0
        %v334 = vadd.f32 %v237, %v333
        %v335 = vpop.f32.mrf.mxu0
        %336 = vmatprep.mubr.f32.mxu0 0.0
        %337 = vmatmul.mubr.f32.gmra.mxu0 %v257
        %v338 = vpop.f32.mrf.mxu0
        %v339 = vadd.f32 %v242, %v338
        %v340 = vpop.f32.mrf.mxu0
        %341 = vmatprep.mubr.f32.mxu0 0.0
        %342 = vmatmul.mubr.f32.gmra.mxu0 %v260
        %v343 = vpop.f32.mrf.mxu0
        %v344 = vadd.f32 %v247, %v343
        %v345 = vpop.f32.mrf.mxu0
        %346 = vdwg.mxu0
        %347 = vxpose.xlu0.b32.start [1/16] %v329, 128
        %348 = vxpose.xlu0.b32.cont [2/16] %v334, 128
        %349 = vxpose.xlu0.b32.cont [3/16] %v339, 128
        %350 = vxpose.xlu0.b32.cont [4/16] %v344, 128
        %351 = vxpose.xlu0.b32.cont [5/16] 0.0, 128
        %352 = vxpose.xlu0.b32.cont [6/16] 0.0, 128
        %353 = vxpose.xlu0.b32.cont [7/16] 0.0, 128
        %354 = vxpose.xlu0.b32.cont [8/16] 0.0, 128
        %355 = vxpose.xlu0.b32.cont [9/16] 0.0, 128
        %356 = vxpose.xlu0.b32.cont [10/16] 0.0, 128
        %357 = vxpose.xlu0.b32.cont [11/16] 0.0, 128
        %358 = vxpose.xlu0.b32.cont [12/16] 0.0, 128
        %359 = vxpose.xlu0.b32.cont [13/16] 0.0, 128
        %360 = vxpose.xlu0.b32.cont [14/16] 0.0, 128
        %361 = vxpose.xlu0.b32.cont [15/16] 0.0, 128
        %362 = vxpose.xlu0.b32.end [16/16] 0.0, 128
        %v363 = vpop.trf.xlu0
        %v364 = vpop.trf.xlu0
        %v365 = vpop.trf.xlu0
        %v366 = vpop.trf.xlu0
        %v367 = vpop.trf.xlu0
        %v368 = vpop.trf.xlu0
        %v369 = vpop.trf.xlu0
        %v370 = vpop.trf.xlu0
        %v371 = vpop.trf.xlu0
        %v372 = vpop.trf.xlu0
        %v373 = vpop.trf.xlu0
        %v374 = vpop.trf.xlu0
        %v375 = vpop.trf.xlu0
        %v376 = vpop.trf.xlu0
        %v377 = vpop.trf.xlu0
        %v378 = vpop.trf.xlu0
        %vm379 = vcmask 244736
        %380 = vst.msk [vmem:[%s215] sm:$0xff] %vm379, %v363
        %381 = vst.msk [vmem:[%s215 + $0x8] sm:$0xff] %vm379, %v364
        %382 = vst.msk [vmem:[%s215 + $0x10] sm:$0xff] %vm379, %v365
        %383 = vst.msk [vmem:[%s215 + $0x18] sm:$0xff] %vm379, %v366
        %384 = vst.msk [vmem:[%s215 + $0x20] sm:$0xff] %vm379, %v367
        %385 = vst.msk [vmem:[%s215 + $0x28] sm:$0xff] %vm379, %v368
        %386 = vst.msk [vmem:[%s215 + $0x30] sm:$0xff] %vm379, %v369
        %387 = vst.msk [vmem:[%s215 + $0x38] sm:$0xff] %vm379, %v370
        %388 = vst.msk [vmem:[%s215 + $0x40] sm:$0xff] %vm379, %v371
        %389 = vst.msk [vmem:[%s215 + $0x48] sm:$0xff] %vm379, %v372
        %390 = vst.msk [vmem:[%s215 + $0x50] sm:$0xff] %vm379, %v373
        %391 = vst.msk [vmem:[%s215 + $0x58] sm:$0xff] %vm379, %v374
        %392 = vst.msk [vmem:[%s215 + $0x60] sm:$0xff] %vm379, %v375
        %393 = vst.msk [vmem:[%s215 + $0x68] sm:$0xff] %vm379, %v376
        %394 = vst.msk [vmem:[%s215 + $0x70] sm:$0xff] %vm379, %v377
        %395 = vst.msk [vmem:[%s215 + $0x78] sm:$0xff] %vm379, %v378
        %s396 = smul.u32 16, %s22
        %p397 = scmp.lt.s32.totalorder %s21, 1
        %s398 = scalar_select %p397, %s21, 1
        %p399 = scmp.lt.s32.totalorder %s396, 31
        %s400 = scalar_select %p399, %s396, 31
        %s401 = smul.addr %s398, 32
        %s402 = sadd.s32 %s400, %s401
        %s403 = smul.addr %s402, 8
        %s404 = scalar_lea.vmem %s3, %s403
        // Predicated region
        $region37: #{tpu_custom_call.1} parent=31 // pred_check
          %p405 = pneg %p119
        $region38: #{tpu_custom_call.1} parent=31 // pred_check_branch
          %407 = sbr.rel (%p405) target = $region40
        $region39: #{tpu_custom_call.1} parent=31 // pred_region
          %s408 = smul.u32 16, %s22
        $region40: #{tpu_custom_call.1} parent=31 // pred_fallthru
          _
      $region32: #{tpu_custom_call.1} parent=5 // pred_fallthru
        _
      %p409 = scmp.le.s32.totalorder 2, %s12
      // Predicated region
      $region41: #{tpu_custom_call.1} parent=5 // pred_check
        %p410 = pneg %p409
      $region42: #{tpu_custom_call.1} parent=5 // pred_check_branch
        %412 = sbr.rel (%p410) target = $region44
      $region43: #{tpu_custom_call.1} parent=5 // pred_region
        %s413 = ssub.s32 %s12, 2
        // Predicated region
        $region45: #{tpu_custom_call.1} parent=43 // pred_check
          %p414 = pneg %p125
        $region46: #{tpu_custom_call.1} parent=43 // pred_check_branch
          %416 = sbr.rel (%p414) target = $region48
        $region47: #{tpu_custom_call.1} parent=43 // pred_region
          %s417 = smul.u32 16, %s24
          %p418 = scmp.lt.s32.totalorder %s23, 1
          %s419 = scalar_select %p418, %s23, 1
          %p420 = scmp.lt.s32.totalorder %s417, 31
          %s421 = scalar_select %p420, %s417, 31
          %s422 = smul.addr %s419, 32
          %s423 = sadd.s32 %s421, %s422
          %s424 = smul.addr %s423, 8
          %s425 = scalar_lea.vmem %s3, %s424
        $region48: #{tpu_custom_call.1} parent=43 // pred_fallthru
          _
      $region44: #{tpu_custom_call.1} parent=5 // pred_fallthru
        _
    $region6: #{tpu_custom_call.1} parent=1 // loop_footer
      %s16 = sadd.s32 1, %s12
    $region7: #{tpu_custom_call.1} parent=1 // loop_footer_branch
      %11 = sbr.rel target = $region3
    $region8: #{tpu_custom_call.1} parent=1 // loop_exit
      _
    %426 = vsyncpa [#allocation3], 1
    %s427 = scalar_lea.sflag [#allocation3], 1
    %428 = vsyncpa %s427, 1

</llo_original>
